<compile_context>
chip_gen: v7x
topology: tpu7x:2x2x1
jax: 0.10.0
libtpu: 0.0.40
codegen_flags: <defaults>
</compile_context>

<pallas_src>
import functools

import jax
import jax.numpy as jnp
import numpy as np
from jax.experimental import pallas as pl
from jax.experimental.pallas import tpu as pltpu

# ---- static dims implied by CardEncoder(rank_dim=2, suit_dim=2, dist_dim=12) ----
RANK_DIM, SUIT_DIM, DIST_DIM = 2, 2, 12
CARD_DIM = RANK_DIM + SUIT_DIM + DIST_DIM      # 16
VOCAB = 53                                     # 52 cards + padding idx 52
VOCAB_PAD = 64                                 # padded contraction width (sublane-friendly)
HEAD_DIMS = (13, 4, 52)                        # rank / suit / dist heads
HEAD_TOTAL = sum(HEAD_DIMS)                    # 69
HEAD_PAD = 128                                 # lane-dense fused head output
PAD_ID = VOCAB - 1                             # padding_idx=52 -> zero table row


# ----------------------------------------------------------------------------- kernel
def card_encoder_kernel(id_ref, tbl_ref, bias_ref, out_ref):
    ids = id_ref[...]                                                   # [TILE_N, 1] int32
    iota = jax.lax.broadcasted_iota(jnp.int32, (ids.shape[0], VOCAB_PAD), 1)
    onehot = (iota == ids).astype(jnp.float32)                          # [TILE_N, 64]
    # single fused selection matmul: embeddings + emb_proj + all 3 heads
    out_ref[...] = jnp.dot(onehot, tbl_ref[...],
                           preferred_element_type=jnp.float32,
                           precision=jax.lax.Precision.HIGHEST) + bias_ref[...]


# ----------------------------------------------------------------------------- wrapper
def pack_params(params):
    """Fold embeddings, emb_proj and the 3 heads into one [64,128] table + [1,128] bias."""
    (rank_tbl, suit_tbl, dist_tbl, wp, bp,
     w_rank, b_rank, w_suit, b_suit, w_dist, b_dist) = params
    hdot = functools.partial(jnp.dot, precision=jax.lax.Precision.HIGHEST)

    tbl_cat = jnp.concatenate([rank_tbl, suit_tbl, dist_tbl], axis=1)   # [53, 16]
    tbl_proj = hdot(tbl_cat, wp)                                        # [53, 16]
    w_heads = jnp.concatenate([w_rank, w_suit, w_dist], axis=1)         # [16, 69]
    b_heads = jnp.concatenate([b_rank, b_suit, b_dist])[None, :]        # [1, 69]

    big_tbl = hdot(tbl_proj, w_heads)                                   # [53, 69]
    big_tbl = jnp.pad(big_tbl, ((0, VOCAB_PAD - VOCAB),
                                (0, HEAD_PAD - HEAD_TOTAL)))            # [64, 128]
    big_bias = hdot(bp[None, :], w_heads) + b_heads                     # [1, 69]
    big_bias = jnp.pad(big_bias, ((0, 0), (0, HEAD_PAD - HEAD_TOTAL)))  # [1, 128]
    return big_tbl, big_bias


def _choose_tile(n):
    """Big tiles to amortize per-step overhead, but >=2 grid steps (v7x megacore)."""
    n128 = -(-n // 128) * 128
    if n128 < 256:
        return 128
    half = (n128 // 2) // 128 * 128
    return min(512, half)


def card_encoder_pallas(card_id, packed):
    big_tbl, big_bias = packed
    n = card_id.shape[0]
    tile_n = _choose_tile(n)
    n_pad = pl.cdiv(n, tile_n) * tile_n

    # int32 ids only (4 B/card of HBM input); padded rows use the padding index
    # so they hit the zero table row deterministically (sliced off below anyway).
    ids2d = jnp.pad(card_id.astype(jnp.int32)[:, None],
                    ((0, n_pad - n), (0, 0)), constant_values=PAD_ID)   # [n_pad, 1]

    cost = pl.CostEstimate(
        flops=2 * n_pad * VOCAB_PAD * HEAD_PAD,
        transcendentals=0,
        bytes_accessed=(4 * n_pad                      # ids in
                        + 4 * n_pad * HEAD_PAD          # out
                        + 4 * VOCAB_PAD * HEAD_PAD      # folded table
                        + 4 * HEAD_PAD),                # folded bias
    )

    out = pl.pallas_call(
        card_encoder_kernel,
        out_shape=jax.ShapeDtypeStruct((n_pad, HEAD_PAD), jnp.float32),
        grid_spec=pltpu.PrefetchScalarGridSpec(
            num_scalar_prefetch=0,
            grid=(n_pad // tile_n,),
            in_specs=[
                pl.BlockSpec((tile_n, 1), lambda i: (i, 0)),            # card ids
                pl.BlockSpec((VOCAB_PAD, HEAD_PAD), lambda i: (0, 0)),  # folded table
                pl.BlockSpec((1, HEAD_PAD), lambda i: (0, 0)),          # folded bias
            ],
            out_specs=pl.BlockSpec((tile_n, HEAD_PAD), lambda i: (i, 0)),
        ),
        compiler_params=pltpu.CompilerParams(
            dimension_semantics=("parallel",)),
        cost_estimate=cost,
    )(ids2d, big_tbl, big_bias)

    rank_pred = out[:n, 0:13]
    suit_pred = out[:n, 13:17]
    dist_pred = out[:n, 17:HEAD_TOTAL]
    return rank_pred, suit_pred, dist_pred


# ----------------------------------------------------------------------------- pure-JAX reference
def card_encoder_ref(card_id, params):
    (rank_tbl, suit_tbl, dist_tbl, wp, bp,
     w_rank, b_rank, w_suit, b_suit, w_dist, b_dist) = params
    hdot = functools.partial(jnp.dot, precision=jax.lax.Precision.HIGHEST)
    rank_emb = rank_tbl[card_id]
    suit_emb = suit_tbl[card_id]
    dist_emb = dist_tbl[card_id]
    emb_cat = jnp.concatenate([rank_emb, suit_emb, dist_emb], axis=1)
    card_emb = hdot(emb_cat, wp) + bp
    return (hdot(card_emb, w_rank) + b_rank,
            hdot(card_emb, w_suit) + b_suit,
            hdot(card_emb, w_dist) + b_dist)


# ----------------------------------------------------------------------------- main
if __name__ == "__main__":
    key = jax.random.PRNGKey(0)
    keys = jax.random.split(key, 12)
    f32 = jnp.float32

    # small example: 16 card ids in [0, 53), with padding_idx=52 exercised
    N = 16
    card_id = jax.random.randint(keys[0], (N,), 0, VOCAB)
    card_id = card_id.at[-1].set(PAD_ID)
    card_id = card_id.at[-2].set(PAD_ID)

    def emb_table(k, dim):
        t = jax.random.normal(k, (VOCAB, dim), f32) * 0.5
        return t.at[PAD_ID].set(0.0)                   # padding_idx=52 -> zero row

    def lin(k, fan_in, fan_out):
        s = 1.0 / np.sqrt(fan_in)
        w = jax.random.normal(k, (fan_in, fan_out), f32) * s   # [in, out]
        b = jnp.full((fan_out,), 0.01, f32)
        return w, b

    rank_tbl = emb_table(keys[1], RANK_DIM)
    suit_tbl = emb_table(keys[2], SUIT_DIM)
    dist_tbl = emb_table(keys[3], DIST_DIM)
    wp, bp = lin(keys[4], CARD_DIM, CARD_DIM)          # emb_proj
    w_rank, b_rank = lin(keys[5], CARD_DIM, 13)        # rank_head
    w_suit, b_suit = lin(keys[6], CARD_DIM, 4)         # suit_head
    w_dist, b_dist = lin(keys[7], CARD_DIM, 52)        # dist_head

    params = (rank_tbl, suit_tbl, dist_tbl, wp, bp,
              w_rank, b_rank, w_suit, b_suit, w_dist, b_dist)

    packed = pack_params(params)
    rank_pred, suit_pred, dist_pred = card_encoder_pallas(card_id, packed)
    jax.block_until_ready((rank_pred, suit_pred, dist_pred))

    rank_ref, suit_ref, dist_ref = card_encoder_ref(card_id, params)

    assert rank_pred.shape == (N, 13)
    assert suit_pred.shape == (N, 4)
    assert dist_pred.shape == (N, 52)
    np.testing.assert_allclose(np.asarray(rank_pred), np.asarray(rank_ref), rtol=1e-3, atol=1e-3)
    np.testing.assert_allclose(np.asarray(suit_pred), np.asarray(suit_ref), rtol=1e-3, atol=1e-3)
    np.testing.assert_allclose(np.asarray(dist_pred), np.asarray(dist_ref), rtol=1e-3, atol=1e-3)
    assert np.all(np.isfinite(np.asarray(rank_pred)))
    assert np.all(np.isfinite(np.asarray(suit_pred)))
    assert np.all(np.isfinite(np.asarray(dist_pred)))
    print("KERNEL_OK")
</pallas_src>

<mosaic_0001>
module attributes {stable_mosaic.version = 11 : i64} {
  func.func @card_encoder_kernel(%arg0: i32, %arg1: memref<128x1xi32, #tpu.memory_space<vmem>>, %arg2: memref<64x128xf32, #tpu.memory_space<vmem>>, %arg3: memref<1x128xf32, #tpu.memory_space<vmem>>, %arg4: memref<128x128xf32, #tpu.memory_space<vmem>>) attributes {dimension_semantics = [#tpu.dimension_semantics<parallel>], iteration_bounds = array<i64: 1>, scalar_prefetch = 0 : i64, scratch_operands = 0 : i64, tpu.core_type = #tpu.core_type<tc>, window_params = [{transform_indices = @transform_0, window_bounds = array<i64: 128, 1>}, {pipeline_mode = #tpu.pipeline_mode<synchronous>, transform_indices = @transform_1, window_bounds = array<i64: 64, 128>}, {pipeline_mode = #tpu.pipeline_mode<synchronous>, transform_indices = @transform_2, window_bounds = array<i64: 1, 128>}, {transform_indices = @transform_3, window_bounds = array<i64: 128, 128>}]} {
    %c0 = arith.constant 0 : index
    %c0_0 = arith.constant 0 : index
    %0 = vector.load %arg1[%c0, %c0_0] : memref<128x1xi32, #tpu.memory_space<vmem>>, vector<128x1xi32>
    %1 = tpu.iota {dimensions = array<i32: 1>} : vector<128x64xi32>
    %2 = vector.broadcast %0 : vector<128x1xi32> to vector<128x64xi32>
    %3 = arith.cmpi eq, %1, %2 : vector<128x64xi32>
    %4 = arith.extui %3 : vector<128x64xi1> to vector<128x64xi32>
    %5 = arith.sitofp %4 : vector<128x64xi32> to vector<128x64xf32>
    %c0_1 = arith.constant 0 : index
    %c0_2 = arith.constant 0 : index
    %6 = vector.load %arg2[%c0_1, %c0_2] : memref<64x128xf32, #tpu.memory_space<vmem>>, vector<64x128xf32>
    %cst = arith.constant dense<0.000000e+00> : vector<128x128xf32>
    %7 = tpu.matmul %5, %6, %cst {dimension_numbers = #tpu.dot_dimension_numbers<[1], [0], [0], [1], [0, 0, 1, 1], [], []>, precision = #tpu.contract_precision<fp32>} : vector<128x64xf32>, vector<64x128xf32>, vector<128x128xf32> -> vector<128x128xf32>
    %c0_3 = arith.constant 0 : index
    %c0_4 = arith.constant 0 : index
    %8 = vector.load %arg3[%c0_3, %c0_4] : memref<1x128xf32, #tpu.memory_space<vmem>>, vector<1x128xf32>
    %9 = vector.broadcast %8 : vector<1x128xf32> to vector<128x128xf32>
    %10 = arith.addf %7, %9 : vector<128x128xf32>
    %c0_5 = arith.constant 0 : index
    %c0_6 = arith.constant 0 : index
    %11 = vector.load %arg4[%c0_5, %c0_6] : memref<128x128xf32, #tpu.memory_space<vmem>>, vector<128x128xf32>
    tpu.vector_store %arg4[%c0_5, %c0_6], %10 {strides = array<i32>} : memref<128x128xf32, #tpu.memory_space<vmem>>, vector<128x128xf32>,
    return
  }
  func.func @transform_0(%arg0: i32) -> (i32, i32) {
    %c0_i32 = arith.constant 0 : i32
    %c0_i32_0 = arith.constant 0 : i32
    return %arg0, %c0_i32 : i32, i32
  }
  func.func @transform_1(%arg0: i32) -> (i32, i32) {
    %c0_i32 = arith.constant 0 : i32
    %c0_i32_0 = arith.constant 0 : i32
    %c0_i32_1 = arith.constant 0 : i32
    return %c0_i32, %c0_i32_0 : i32, i32
  }
  func.func @transform_2(%arg0: i32) -> (i32, i32) {
    %c0_i32 = arith.constant 0 : i32
    %c0_i32_0 = arith.constant 0 : i32
    %c0_i32_1 = arith.constant 0 : i32
    return %c0_i32, %c0_i32_0 : i32, i32
  }
  func.func @transform_3(%arg0: i32) -> (i32, i32) {
    %c0_i32 = arith.constant 0 : i32
    %c0_i32_0 = arith.constant 0 : i32
    return %arg0, %c0_i32 : i32, i32
  }
}

</mosaic_0001>

<llo_original>
// kernel: tpu_custom_call.1
$region0: #{tpu_custom_call.1}
  #allocation0 [shape = 'u32[]', space=smem, size = 0x4, offset = 0x4, fixed_abs, tag = 'smem constant byte address 0x4 - core index']
  #allocation1 [shape = 'u32[144,128]{1,0:T(1,128)}', space=vmem, size = 0x12000, scoped, tag = 'internal scratch']
  %s0 = inlined_call_operand.vmem [shape: s32[128,1], index: 0, kind: input, shape index: {}]
  %s1 = inlined_call_operand.vmem [shape: f32[64,128], index: 1, kind: input, shape index: {}]
  %s2 = inlined_call_operand.vmem [shape: f32[1,128], index: 2, kind: input, shape index: {}]
  %s3 = inlined_call_operand.hbm [shape: f32[128,128], index: 3, kind: output, shape index: {}]
  %s4 = sld [smem:[#allocation0]]
  $region22: #{tpu_custom_call.1} parent=0
    _
  %s6 = ssub.s32 1, %s4
  %s7 = scalar_select 0, %s6, %s4
  $region1: #{tpu_custom_call.1} parent=0
    #allocation2 [shape = 'u8[65536]{0}', space=vmem, size = 0x10000, scoped, tag = 'output window, operand 0, single buffered']
    #allocation3 [shape = 's32[1]{0}', space=sflag, size = 0x4, scoped, tag = 'scoped memory for tpu_custom_call.1']
    %8 = vsyncpa [#allocation3], 0
    // Predicated region
    $region2: #{tpu_custom_call.1} parent=1 // pred_check
      _
    $region3: #{tpu_custom_call.1} parent=1 // pred_check_branch
      %10 = sbr.rel (0) target = $region5
    $region4: #{tpu_custom_call.1} parent=1 // pred_region
      _
    $region5: #{tpu_custom_call.1} parent=1 // pred_fallthru
      _
    // Predicated region
    $region6: #{tpu_custom_call.1} parent=1 // pred_check
      _
    $region7: #{tpu_custom_call.1} parent=1 // pred_check_branch
      %12 = sbr.rel (0) target = $region9
    $region8: #{tpu_custom_call.1} parent=1 // pred_region
      _
    $region9: #{tpu_custom_call.1} parent=1 // pred_fallthru
      _
    // Predicated region
    $region10: #{tpu_custom_call.1} parent=1 // pred_check
      _
    $region11: #{tpu_custom_call.1} parent=1 // pred_check_branch
      %14 = sbr.rel (0) target = $region13
    $region12: #{tpu_custom_call.1} parent=1 // pred_region
      _
    $region13: #{tpu_custom_call.1} parent=1 // pred_fallthru
      _
    %v15 = vld [vmem:[%s0] sm:$0xff]
    %v16 = vld [vmem:[%s0 + $0x8] sm:$0xff]
    %v17 = vld [vmem:[%s0 + $0x10] sm:$0xff]
    %v18 = vld [vmem:[%s0 + $0x18] sm:$0xff]
    %v19 = vld [vmem:[%s0 + $0x20] sm:$0xff]
    %v20 = vld [vmem:[%s0 + $0x28] sm:$0xff]
    %v21 = vld [vmem:[%s0 + $0x30] sm:$0xff]
    %v22 = vld [vmem:[%s0 + $0x38] sm:$0xff]
    %v23 = vld [vmem:[%s0 + $0x40] sm:$0xff]
    %v24 = vld [vmem:[%s0 + $0x48] sm:$0xff]
    %v25 = vld [vmem:[%s0 + $0x50] sm:$0xff]
    %v26 = vld [vmem:[%s0 + $0x58] sm:$0xff]
    %v27 = vld [vmem:[%s0 + $0x60] sm:$0xff]
    %v28 = vld [vmem:[%s0 + $0x68] sm:$0xff]
    %v29 = vld [vmem:[%s0 + $0x70] sm:$0xff]
    %v30 = vld [vmem:[%s0 + $0x78] sm:$0xff]
    %v31 = vlaneseq
    %v32 = vand.u32 %v31, 127
    %33 = vset.pattern.permute.xlu0 0
    %34 = vperm.xlu0 %33, %v15
    %v35 = vpop.permute.xlu0 %34
    %36 = vset.pattern.permute.xlu0 0
    %37 = vperm.xlu0 %36, %v16
    %v38 = vpop.permute.xlu0 %37
    %39 = vset.pattern.permute.xlu0 0
    %40 = vperm.xlu0 %39, %v17
    %v41 = vpop.permute.xlu0 %40
    %42 = vset.pattern.permute.xlu0 0
    %43 = vperm.xlu0 %42, %v18
    %v44 = vpop.permute.xlu0 %43
    %45 = vset.pattern.permute.xlu0 0
    %46 = vperm.xlu0 %45, %v19
    %v47 = vpop.permute.xlu0 %46
    %48 = vset.pattern.permute.xlu0 0
    %49 = vperm.xlu0 %48, %v20
    %v50 = vpop.permute.xlu0 %49
    %51 = vset.pattern.permute.xlu0 0
    %52 = vperm.xlu0 %51, %v21
    %v53 = vpop.permute.xlu0 %52
    %54 = vset.pattern.permute.xlu0 0
    %55 = vperm.xlu0 %54, %v22
    %v56 = vpop.permute.xlu0 %55
    %57 = vset.pattern.permute.xlu0 0
    %58 = vperm.xlu0 %57, %v23
    %v59 = vpop.permute.xlu0 %58
    %60 = vset.pattern.permute.xlu0 0
    %61 = vperm.xlu0 %60, %v24
    %v62 = vpop.permute.xlu0 %61
    %63 = vset.pattern.permute.xlu0 0
    %64 = vperm.xlu0 %63, %v25
    %v65 = vpop.permute.xlu0 %64
    %66 = vset.pattern.permute.xlu0 0
    %67 = vperm.xlu0 %66, %v26
    %v68 = vpop.permute.xlu0 %67
    %69 = vset.pattern.permute.xlu0 0
    %70 = vperm.xlu0 %69, %v27
    %v71 = vpop.permute.xlu0 %70
    %72 = vset.pattern.permute.xlu0 0
    %73 = vperm.xlu0 %72, %v28
    %v74 = vpop.permute.xlu0 %73
    %75 = vset.pattern.permute.xlu0 0
    %76 = vperm.xlu0 %75, %v29
    %v77 = vpop.permute.xlu0 %76
    %78 = vset.pattern.permute.xlu0 0
    %79 = vperm.xlu0 %78, %v30
    %v80 = vpop.permute.xlu0 %79
    %vm81 = vcmp.eq.s32.totalorder %v32, %v35
    %vm82 = vcmp.eq.s32.totalorder %v32, %v38
    %vm83 = vcmp.eq.s32.totalorder %v32, %v41
    %vm84 = vcmp.eq.s32.totalorder %v32, %v44
    %vm85 = vcmp.eq.s32.totalorder %v32, %v47
    %vm86 = vcmp.eq.s32.totalorder %v32, %v50
    %vm87 = vcmp.eq.s32.totalorder %v32, %v53
    %vm88 = vcmp.eq.s32.totalorder %v32, %v56
    %vm89 = vcmp.eq.s32.totalorder %v32, %v59
    %vm90 = vcmp.eq.s32.totalorder %v32, %v62
    %vm91 = vcmp.eq.s32.totalorder %v32, %v65
    %vm92 = vcmp.eq.s32.totalorder %v32, %v68
    %vm93 = vcmp.eq.s32.totalorder %v32, %v71
    %vm94 = vcmp.eq.s32.totalorder %v32, %v74
    %vm95 = vcmp.eq.s32.totalorder %v32, %v77
    %vm96 = vcmp.eq.s32.totalorder %v32, %v80
    %v97 = vsel %vm81, 1, 0
    %v98 = vsel %vm82, 1, 0
    %v99 = vsel %vm83, 1, 0
    %v100 = vsel %vm84, 1, 0
    %v101 = vsel %vm85, 1, 0
    %v102 = vsel %vm86, 1, 0
    %v103 = vsel %vm87, 1, 0
    %v104 = vsel %vm88, 1, 0
    %v105 = vsel %vm89, 1, 0
    %v106 = vsel %vm90, 1, 0
    %v107 = vsel %vm91, 1, 0
    %v108 = vsel %vm92, 1, 0
    %v109 = vsel %vm93, 1, 0
    %v110 = vsel %vm94, 1, 0
    %v111 = vsel %vm95, 1, 0
    %v112 = vsel %vm96, 1, 0
    %v113 = vcvt.s32.f32 %v97
    %v114 = vcvt.s32.f32 %v98
    %v115 = vcvt.s32.f32 %v99
    %v116 = vcvt.s32.f32 %v100
    %v117 = vcvt.s32.f32 %v101
    %v118 = vcvt.s32.f32 %v102
    %v119 = vcvt.s32.f32 %v103
    %v120 = vcvt.s32.f32 %v104
    %v121 = vcvt.s32.f32 %v105
    %v122 = vcvt.s32.f32 %v106
    %v123 = vcvt.s32.f32 %v107
    %v124 = vcvt.s32.f32 %v108
    %v125 = vcvt.s32.f32 %v109
    %v126 = vcvt.s32.f32 %v110
    %v127 = vcvt.s32.f32 %v111
    %v128 = vcvt.s32.f32 %v112
    %v129 = vld [vmem:[%s1] sm:$0xff]
    %v130 = vld [vmem:[%s1 + $0x8] sm:$0xff]
    %v131 = vld [vmem:[%s1 + $0x10] sm:$0xff]
    %v132 = vld [vmem:[%s1 + $0x18] sm:$0xff]
    %v133 = vld [vmem:[%s1 + $0x20] sm:$0xff]
    %v134 = vld [vmem:[%s1 + $0x28] sm:$0xff]
    %v135 = vld [vmem:[%s1 + $0x30] sm:$0xff]
    %v136 = vld [vmem:[%s1 + $0x38] sm:$0xff]
    %v137 = vld [vmem:[%s2] sm:$0x1]
    %v139 = vlaneseq
    %v140 = vshrl.u32 %v139, 7
    %v141 = vsub.s32 0, %v140
    %v142 = vrot.slane %v137, %v141
    %vm144 = vcmask 523264
    %v146 = vsel %vm144, %v113, 0
    %v149 = vsel %vm144, %v114, 0
    %v152 = vsel %vm144, %v115, 0
    %v155 = vsel %vm144, %v116, 0
    %v158 = vsel %vm144, %v117, 0
    %v161 = vsel %vm144, %v118, 0
    %v164 = vsel %vm144, %v119, 0
    %v167 = vsel %vm144, %v120, 0
    %v170 = vsel %vm144, %v121, 0
    %v173 = vsel %vm144, %v122, 0
    %v176 = vsel %vm144, %v123, 0
    %v179 = vsel %vm144, %v124, 0
    %v182 = vsel %vm144, %v125, 0
    %v185 = vsel %vm144, %v126, 0
    %v188 = vsel %vm144, %v127, 0
    %v191 = vsel %vm144, %v128, 0
    %193 = vmatprep.subr.mxu0 0.0
    %v194 = vand.u32 %v129, 4294901760
    %195 = vmatpush1.msra.mxu0 %v194
    %196 = vmatprep.subr.mxu0 0.0
    %v197 = vand.u32 %v130, 4294901760
    %198 = vmatpush1.msra.mxu0 %v197
    %199 = vmatprep.subr.mxu0 0.0
    %v200 = vand.u32 %v131, 4294901760
    %201 = vmatpush1.msra.mxu0 %v200
    %202 = vmatprep.subr.mxu0 0.0
    %v203 = vand.u32 %v132, 4294901760
    %204 = vmatpush1.msra.mxu0 %v203
    %205 = vmatprep.subr.mxu0 0.0
    %v206 = vand.u32 %v133, 4294901760
    %207 = vmatpush1.msra.mxu0 %v206
    %208 = vmatprep.subr.mxu0 0.0
    %v209 = vand.u32 %v134, 4294901760
    %210 = vmatpush1.msra.mxu0 %v209
    %211 = vmatprep.subr.mxu0 0.0
    %v212 = vand.u32 %v135, 4294901760
    %213 = vmatpush1.msra.mxu0 %v212
    %214 = vmatprep.subr.mxu0 0.0
    %v215 = vand.u32 %v136, 4294901760
    %216 = vmatpush1.msra.mxu0 %v215
    %217 = vmatprep.subr.mxu0 0.0
    %218 = vmatpush1.msra.mxu0 0.0
    %219 = vmatprep.subr.mxu0 0.0
    %220 = vmatpush1.msra.mxu0 0.0
    %221 = vmatprep.subr.mxu0 0.0
    %222 = vmatpush1.msra.mxu0 0.0
    %223 = vmatprep.subr.mxu0 0.0
    %224 = vmatpush1.msra.mxu0 0.0
    %225 = vmatprep.subr.mxu0 0.0
    %226 = vmatpush1.msra.mxu0 0.0
    %227 = vmatprep.subr.mxu0 0.0
    %228 = vmatpush1.msra.mxu0 0.0
    %229 = vmatprep.subr.mxu0 0.0
    %230 = vmatpush1.msra.mxu0 0.0
    %231 = vmatprep.subr.mxu0 0.0
    %232 = vmatpush1.msra.mxu0 0.0
    %233 = vmatprep.subr.mxu0 0.0
    %234 = vmatpush1.msra.mxu0 0.0
    %235 = vmatprep.subr.mxu0 0.0
    %236 = vmatpush1.msra.mxu0 0.0
    %237 = vmatprep.subr.mxu0 0.0
    %238 = vmatpush1.msra.mxu0 0.0
    %239 = vmatprep.subr.mxu0 0.0
    %240 = vmatpush1.msra.mxu0 0.0
    %241 = vmatprep.subr.mxu0 0.0
    %242 = vmatpush1.msra.mxu0 0.0
    %243 = vmatprep.subr.mxu0 0.0
    %244 = vmatpush1.msra.mxu0 0.0
    %245 = vmatprep.subr.mxu0 0.0
    %246 = vmatpush1.msra.mxu0 0.0
    %247 = vmatprep.subr.mxu0 0.0
    %248 = vmatpush1.msra.mxu0 0.0
    %249 = vmatprep.subr.mxu0 0.0
    %250 = vmatpush1.msra.mxu0 0.0
    %251 = vmatprep.subr.mxu0 0.0
    %252 = vmatpush1.msra.mxu0 0.0
    %253 = vmatprep.subr.mxu0 0.0
    %254 = vmatpush1.msra.mxu0 0.0
    %255 = vmatprep.subr.mxu0 0.0
    %256 = vmatpush1.msra.mxu0 0.0
    %257 = vmatprep.subr.mxu0 0.0
    %258 = vmatpush1.msra.mxu0 0.0
    %259 = vmatprep.subr.mxu0 0.0
    %260 = vmatpush1.msra.mxu0 0.0
    %261 = vmatprep.subr.mxu0 0.0
    %262 = vmatpush1.msra.mxu0 0.0
    %263 = vmatprep.subr.mxu0 0.0
    %264 = vmatpush1.msra.mxu0 0.0
    %265 = vmatprep.mubr.f32.mxu0 0.0
    %v266 = vand.u32 %v146, 4294901760
    %v267 = vsub.f32 %v146, %v266
    %v268 = vand.u32 %v267, 4294901760
    %v269 = vsub.f32 %v267, %v268
    %v270 = vand.u32 %v269, 4294901760
    %271 = vmatmul.mubr.f32.gmra.mrb[0].mxu0 %v270
    %v272 = vpop.f32.mrb[0].mxu0
    %v273 = vadd.f32 %v142, %v272
    %v274 = vpop.f32.mrb[0].mxu0
    %275 = vmatprep.mubr.f32.mxu0 0.0
    %v276 = vand.u32 %v149, 4294901760
    %v277 = vsub.f32 %v149, %v276
    %v278 = vand.u32 %v277, 4294901760
    %v279 = vsub.f32 %v277, %v278
    %v280 = vand.u32 %v279, 4294901760
    %281 = vmatmul.mubr.f32.gmra.mrb[0].mxu0 %v280
    %v282 = vpop.f32.mrb[0].mxu0
    %v283 = vadd.f32 %v142, %v282
    %v284 = vpop.f32.mrb[0].mxu0
    %285 = vmatprep.mubr.f32.mxu0 0.0
    %v286 = vand.u32 %v152, 4294901760
    %v287 = vsub.f32 %v152, %v286
    %v288 = vand.u32 %v287, 4294901760
    %v289 = vsub.f32 %v287, %v288
    %v290 = vand.u32 %v289, 4294901760
    %291 = vmatmul.mubr.f32.gmra.mrb[0].mxu0 %v290
    %v292 = vpop.f32.mrb[0].mxu0
    %v293 = vadd.f32 %v142, %v292
    %v294 = vpop.f32.mrb[0].mxu0
    %295 = vmatprep.mubr.f32.mxu0 0.0
    %v296 = vand.u32 %v155, 4294901760
    %v297 = vsub.f32 %v155, %v296
    %v298 = vand.u32 %v297, 4294901760
    %v299 = vsub.f32 %v297, %v298
    %v300 = vand.u32 %v299, 4294901760
    %301 = vmatmul.mubr.f32.gmra.mrb[0].mxu0 %v300
    %v302 = vpop.f32.mrb[0].mxu0
    %v303 = vadd.f32 %v142, %v302
    %v304 = vpop.f32.mrb[0].mxu0
    %305 = vmatprep.mubr.f32.mxu0 0.0
    %v306 = vand.u32 %v158, 4294901760
    %v307 = vsub.f32 %v158, %v306
    %v308 = vand.u32 %v307, 4294901760
    %v309 = vsub.f32 %v307, %v308
    %v310 = vand.u32 %v309, 4294901760
    %311 = vmatmul.mubr.f32.gmra.mrb[0].mxu0 %v310
    %v312 = vpop.f32.mrb[0].mxu0
    %v313 = vadd.f32 %v142, %v312
    %v314 = vpop.f32.mrb[0].mxu0
    %315 = vmatprep.mubr.f32.mxu0 0.0
    %v316 = vand.u32 %v161, 4294901760
    %v317 = vsub.f32 %v161, %v316
    %v318 = vand.u32 %v317, 4294901760
    %v319 = vsub.f32 %v317, %v318
    %v320 = vand.u32 %v319, 4294901760
    %321 = vmatmul.mubr.f32.gmra.mrb[0].mxu0 %v320
    %v322 = vpop.f32.mrb[0].mxu0
    %v323 = vadd.f32 %v142, %v322
    %v324 = vpop.f32.mrb[0].mxu0
    %325 = vmatprep.mubr.f32.mxu0 0.0
    %v326 = vand.u32 %v164, 4294901760
    %v327 = vsub.f32 %v164, %v326
    %v328 = vand.u32 %v327, 4294901760
    %v329 = vsub.f32 %v327, %v328
    %v330 = vand.u32 %v329, 4294901760
    %331 = vmatmul.mubr.f32.gmra.mrb[0].mxu0 %v330
    %v332 = vpop.f32.mrb[0].mxu0
    %v333 = vadd.f32 %v142, %v332
    %v334 = vpop.f32.mrb[0].mxu0
    %335 = vmatprep.mubr.f32.mxu0 0.0
    %v336 = vand.u32 %v167, 4294901760
    %v337 = vsub.f32 %v167, %v336
    %v338 = vand.u32 %v337, 4294901760
    %v339 = vsub.f32 %v337, %v338
    %v340 = vand.u32 %v339, 4294901760
    %341 = vmatmul.mubr.f32.gmra.mrb[0].mxu0 %v340
    %v342 = vpop.f32.mrb[0].mxu0
    %v343 = vadd.f32 %v142, %v342
    %v344 = vpop.f32.mrb[0].mxu0
    %345 = vmatprep.mubr.f32.mxu0 0.0
    %v346 = vand.u32 %v170, 4294901760
    %v347 = vsub.f32 %v170, %v346
    %v348 = vand.u32 %v347, 4294901760
    %v349 = vsub.f32 %v347, %v348
    %v350 = vand.u32 %v349, 4294901760
    %351 = vmatmul.mubr.f32.gmra.mrb[0].mxu0 %v350
    %v352 = vpop.f32.mrb[0].mxu0
    %v353 = vadd.f32 %v142, %v352
    %v354 = vpop.f32.mrb[0].mxu0
    %355 = vmatprep.mubr.f32.mxu0 0.0
    %v356 = vand.u32 %v173, 4294901760
    %v357 = vsub.f32 %v173, %v356
    %v358 = vand.u32 %v357, 4294901760
    %v359 = vsub.f32 %v357, %v358
    %v360 = vand.u32 %v359, 4294901760
    %361 = vmatmul.mubr.f32.gmra.mrb[0].mxu0 %v360
    %v362 = vpop.f32.mrb[0].mxu0
    %v363 = vadd.f32 %v142, %v362
    %v364 = vpop.f32.mrb[0].mxu0
    %365 = vmatprep.mubr.f32.mxu0 0.0
    %v366 = vand.u32 %v176, 4294901760
    %v367 = vsub.f32 %v176, %v366
    %v368 = vand.u32 %v367, 4294901760
    %v369 = vsub.f32 %v367, %v368
    %v370 = vand.u32 %v369, 4294901760
    %371 = vmatmul.mubr.f32.gmra.mrb[0].mxu0 %v370
    %v372 = vpop.f32.mrb[0].mxu0
    %v373 = vadd.f32 %v142, %v372
    %v374 = vpop.f32.mrb[0].mxu0
    %375 = vmatprep.mubr.f32.mxu0 0.0
    %v376 = vand.u32 %v179, 4294901760
    %v377 = vsub.f32 %v179, %v376
    %v378 = vand.u32 %v377, 4294901760
    %v379 = vsub.f32 %v377, %v378
    %v380 = vand.u32 %v379, 4294901760
    %381 = vmatmul.mubr.f32.gmra.mrb[0].mxu0 %v380
    %v382 = vpop.f32.mrb[0].mxu0
    %v383 = vadd.f32 %v142, %v382
    %v384 = vpop.f32.mrb[0].mxu0
    %385 = vmatprep.mubr.f32.mxu0 0.0
    %v386 = vand.u32 %v182, 4294901760
    %v387 = vsub.f32 %v182, %v386
    %v388 = vand.u32 %v387, 4294901760
    %v389 = vsub.f32 %v387, %v388
    %v390 = vand.u32 %v389, 4294901760
    %391 = vmatmul.mubr.f32.gmra.mrb[0].mxu0 %v390
    %v392 = vpop.f32.mrb[0].mxu0
    %v393 = vadd.f32 %v142, %v392
    %v394 = vpop.f32.mrb[0].mxu0
    %395 = vmatprep.mubr.f32.mxu0 0.0
    %v396 = vand.u32 %v185, 4294901760
    %v397 = vsub.f32 %v185, %v396
    %v398 = vand.u32 %v397, 4294901760
    %v399 = vsub.f32 %v397, %v398
    %v400 = vand.u32 %v399, 4294901760
    %401 = vmatmul.mubr.f32.gmra.mrb[0].mxu0 %v400
    %v402 = vpop.f32.mrb[0].mxu0
    %v403 = vadd.f32 %v142, %v402
    %v404 = vpop.f32.mrb[0].mxu0
    %405 = vmatprep.mubr.f32.mxu0 0.0
    %v406 = vand.u32 %v188, 4294901760
    %v407 = vsub.f32 %v188, %v406
    %v408 = vand.u32 %v407, 4294901760
    %v409 = vsub.f32 %v407, %v408
    %v410 = vand.u32 %v409, 4294901760
    %411 = vmatmul.mubr.f32.gmra.mrb[0].mxu0 %v410
    %v412 = vpop.f32.mrb[0].mxu0
    %v413 = vadd.f32 %v142, %v412
    %v414 = vpop.f32.mrb[0].mxu0
    %415 = vmatprep.mubr.f32.mxu0 0.0
    %v416 = vand.u32 %v191, 4294901760
    %v417 = vsub.f32 %v191, %v416
    %v418 = vand.u32 %v417, 4294901760
    %v419 = vsub.f32 %v417, %v418
    %v420 = vand.u32 %v419, 4294901760
    %421 = vmatmul.mubr.f32.gmra.mrb[0].mxu0 %v420
    %v422 = vpop.f32.mrb[0].mxu0
    %v423 = vadd.f32 %v142, %v422
    %v424 = vpop.f32.mrb[0].mxu0
    %425 = vdwg.mxu0
    %426 = vmatprep.subr.mxu0 0.0
    %v427 = vand.u32 %v129, 4294901760
    %v428 = vsub.f32 %v129, %v427
    %v429 = vand.u32 %v428, 4294901760
    %v430 = vsub.f32 %v428, %v429
    %v431 = vand.u32 %v430, 4294901760
    %432 = vmatpush1.msra.mxu0 %v431
    %433 = vmatprep.subr.mxu0 0.0
    %v434 = vand.u32 %v130, 4294901760
    %v435 = vsub.f32 %v130, %v434
    %v436 = vand.u32 %v435, 4294901760
    %v437 = vsub.f32 %v435, %v436
    %v438 = vand.u32 %v437, 4294901760
    %439 = vmatpush1.msra.mxu0 %v438
    %440 = vmatprep.subr.mxu0 0.0
    %v441 = vand.u32 %v131, 4294901760
    %v442 = vsub.f32 %v131, %v441
    %v443 = vand.u32 %v442, 4294901760
    %v444 = vsub.f32 %v442, %v443
    %v445 = vand.u32 %v444, 4294901760
    %446 = vmatpush1.msra.mxu0 %v445
    %447 = vmatprep.subr.mxu0 0.0
    %v448 = vand.u32 %v132, 4294901760
    %v449 = vsub.f32 %v132, %v448
    %v450 = vand.u32 %v449, 4294901760
    %v451 = vsub.f32 %v449, %v450
    %v452 = vand.u32 %v451, 4294901760
    %453 = vmatpush1.msra.mxu0 %v452
    %454 = vmatprep.subr.mxu0 0.0
    %v455 = vand.u32 %v133, 4294901760
    %v456 = vsub.f32 %v133, %v455
    %v457 = vand.u32 %v456, 4294901760
    %v458 = vsub.f32 %v456, %v457
    %v459 = vand.u32 %v458, 4294901760
    %460 = vmatpush1.msra.mxu0 %v459
    %461 = vmatprep.subr.mxu0 0.0
    %v462 = vand.u32 %v134, 4294901760
    %v463 = vsub.f32 %v134, %v462
    %v464 = vand.u32 %v463, 4294901760
    %v465 = vsub.f32 %v463, %v464
    %v466 = vand.u32 %v465, 4294901760
    %467 = vmatpush1.msra.mxu0 %v466
    %468 = vmatprep.subr.mxu0 0.0
    %v469 = vand.u32 %v135, 4294901760
    %v470 = vsub.f32 %v135, %v469
    %v471 = vand.u32 %v470, 4294901760
    %v472 = vsub.f32 %v470, %v471
    %v473 = vand.u32 %v472, 4294901760
    %474 = vmatpush1.msra.mxu0 %v473
    %475 = vmatprep.subr.mxu0 0.0
    %v476 = vand.u32 %v136, 4294901760
    %v477 = vsub.f32 %v136, %v476
    %v478 = vand.u32 %v477, 4294901760
    %v479 = vsub.f32 %v477, %v478
    %v480 = vand.u32 %v479, 4294901760
    %481 = vmatpush1.msra.mxu0 %v480
    %482 = vmatprep.subr.mxu0 0.0
    %483 = vmatpush1.msra.mxu0 0.0
    %484 = vmatprep.subr.mxu0 0.0
    %485 = vmatpush1.msra.mxu0 0.0
    %486 = vmatprep.subr.mxu0 0.0
    %487 = vmatpush1.msra.mxu0 0.0
    %488 = vmatprep.subr.mxu0 0.0
    %489 = vmatpush1.msra.mxu0 0.0
    %490 = vmatprep.subr.mxu0 0.0
    %491 = vmatpush1.msra.mxu0 0.0
    %492 = vmatprep.subr.mxu0 0.0
    %493 = vmatpush1.msra.mxu0 0.0
    %494 = vmatprep.subr.mxu0 0.0
    %495 = vmatpush1.msra.mxu0 0.0
    %496 = vmatprep.subr.mxu0 0.0
    %497 = vmatpush1.msra.mxu0 0.0
    %498 = vmatprep.subr.mxu0 0.0
    %499 = vmatpush1.msra.mxu0 0.0
    %500 = vmatprep.subr.mxu0 0.0
    %501 = vmatpush1.msra.mxu0 0.0
    %502 = vmatprep.subr.mxu0 0.0
    %503 = vmatpush1.msra.mxu0 0.0
    %504 = vmatprep.subr.mxu0 0.0
    %505 = vmatpush1.msra.mxu0 0.0
    %506 = vmatprep.subr.mxu0 0.0
    %507 = vmatpush1.msra.mxu0 0.0
    %508 = vmatprep.subr.mxu0 0.0
    %509 = vmatpush1.msra.mxu0 0.0
    %510 = vmatprep.subr.mxu0 0.0
    %511 = vmatpush1.msra.mxu0 0.0
    %512 = vmatprep.subr.mxu0 0.0
    %513 = vmatpush1.msra.mxu0 0.0
    %514 = vmatprep.subr.mxu0 0.0
    %515 = vmatpush1.msra.mxu0 0.0
    %516 = vmatprep.subr.mxu0 0.0
    %517 = vmatpush1.msra.mxu0 0.0
    %518 = vmatprep.subr.mxu0 0.0
    %519 = vmatpush1.msra.mxu0 0.0
    %520 = vmatprep.subr.mxu0 0.0
    %521 = vmatpush1.msra.mxu0 0.0
    %522 = vmatprep.subr.mxu0 0.0
    %523 = vmatpush1.msra.mxu0 0.0
    %524 = vmatprep.subr.mxu0 0.0
    %525 = vmatpush1.msra.mxu0 0.0
    %526 = vmatprep.subr.mxu0 0.0
    %527 = vmatpush1.msra.mxu0 0.0
    %528 = vmatprep.subr.mxu0 0.0
    %529 = vmatpush1.msra.mxu0 0.0
    %530 = vmatprep.mubr.f32.mxu0 0.0
    %v531 = vand.u32 %v146, 4294901760
    %532 = vmatmul.mubr.f32.gmra.mrb[0].mxu0 %v531
    %v533 = vpop.f32.mrb[0].mxu0
    %v534 = vadd.f32 %v273, %v533
    %v535 = vpop.f32.mrb[0].mxu0
    %536 = vmatprep.mubr.f32.mxu0 0.0
    %v537 = vand.u32 %v149, 4294901760
    %538 = vmatmul.mubr.f32.gmra.mrb[0].mxu0 %v537
    %v539 = vpop.f32.mrb[0].mxu0
    %v540 = vadd.f32 %v283, %v539
    %v541 = vpop.f32.mrb[0].mxu0
    %542 = vmatprep.mubr.f32.mxu0 0.0
    %v543 = vand.u32 %v152, 4294901760
    %544 = vmatmul.mubr.f32.gmra.mrb[0].mxu0 %v543
    %v545 = vpop.f32.mrb[0].mxu0
    %v546 = vadd.f32 %v293, %v545
    %v547 = vpop.f32.mrb[0].mxu0
    %548 = vmatprep.mubr.f32.mxu0 0.0
    %v549 = vand.u32 %v155, 4294901760
    %550 = vmatmul.mubr.f32.gmra.mrb[0].mxu0 %v549
    %v551 = vpop.f32.mrb[0].mxu0
    %v552 = vadd.f32 %v303, %v551
    %v553 = vpop.f32.mrb[0].mxu0
    %554 = vmatprep.mubr.f32.mxu0 0.0
    %v555 = vand.u32 %v158, 4294901760
    %556 = vmatmul.mubr.f32.gmra.mrb[0].mxu0 %v555
    %v557 = vpop.f32.mrb[0].mxu0
    %v558 = vadd.f32 %v313, %v557
    %v559 = vpop.f32.mrb[0].mxu0
    %560 = vmatprep.mubr.f32.mxu0 0.0
    %v561 = vand.u32 %v161, 4294901760
    %562 = vmatmul.mubr.f32.gmra.mrb[0].mxu0 %v561
    %v563 = vpop.f32.mrb[0].mxu0
    %v564 = vadd.f32 %v323, %v563
    %v565 = vpop.f32.mrb[0].mxu0
    %566 = vmatprep.mubr.f32.mxu0 0.0
    %v567 = vand.u32 %v164, 4294901760
    %568 = vmatmul.mubr.f32.gmra.mrb[0].mxu0 %v567
    %v569 = vpop.f32.mrb[0].mxu0
    %v570 = vadd.f32 %v333, %v569
    %v571 = vpop.f32.mrb[0].mxu0
    %572 = vmatprep.mubr.f32.mxu0 0.0
    %v573 = vand.u32 %v167, 4294901760
    %574 = vmatmul.mubr.f32.gmra.mrb[0].mxu0 %v573
    %v575 = vpop.f32.mrb[0].mxu0
    %v576 = vadd.f32 %v343, %v575
    %v577 = vpop.f32.mrb[0].mxu0
    %578 = vmatprep.mubr.f32.mxu0 0.0
    %v579 = vand.u32 %v170, 4294901760
    %580 = vmatmul.mubr.f32.gmra.mrb[0].mxu0 %v579
    %v581 = vpop.f32.mrb[0].mxu0
    %v582 = vadd.f32 %v353, %v581
    %v583 = vpop.f32.mrb[0].mxu0
    %584 = vmatprep.mubr.f32.mxu0 0.0
    %v585 = vand.u32 %v173, 4294901760
    %586 = vmatmul.mubr.f32.gmra.mrb[0].mxu0 %v585
    %v587 = vpop.f32.mrb[0].mxu0
    %v588 = vadd.f32 %v363, %v587
    %v589 = vpop.f32.mrb[0].mxu0
    %590 = vmatprep.mubr.f32.mxu0 0.0
    %v591 = vand.u32 %v176, 4294901760
    %592 = vmatmul.mubr.f32.gmra.mrb[0].mxu0 %v591
    %v593 = vpop.f32.mrb[0].mxu0
    %v594 = vadd.f32 %v373, %v593
    %v595 = vpop.f32.mrb[0].mxu0
    %596 = vmatprep.mubr.f32.mxu0 0.0
    %v597 = vand.u32 %v179, 4294901760
    %598 = vmatmul.mubr.f32.gmra.mrb[0].mxu0 %v597
    %v599 = vpop.f32.mrb[0].mxu0
    %v600 = vadd.f32 %v383, %v599
    %v601 = vpop.f32.mrb[0].mxu0
    %602 = vmatprep.mubr.f32.mxu0 0.0
    %v603 = vand.u32 %v182, 4294901760
    %604 = vmatmul.mubr.f32.gmra.mrb[0].mxu0 %v603
    %v605 = vpop.f32.mrb[0].mxu0
    %v606 = vadd.f32 %v393, %v605
    %v607 = vpop.f32.mrb[0].mxu0
    %608 = vmatprep.mubr.f32.mxu0 0.0
    %v609 = vand.u32 %v185, 4294901760
    %610 = vmatmul.mubr.f32.gmra.mrb[0].mxu0 %v609
    %v611 = vpop.f32.mrb[0].mxu0
    %v612 = vadd.f32 %v403, %v611
    %v613 = vpop.f32.mrb[0].mxu0
    %614 = vmatprep.mubr.f32.mxu0 0.0
    %v615 = vand.u32 %v188, 4294901760
    %616 = vmatmul.mubr.f32.gmra.mrb[0].mxu0 %v615
    %v617 = vpop.f32.mrb[0].mxu0
    %v618 = vadd.f32 %v413, %v617
    %v619 = vpop.f32.mrb[0].mxu0
    %620 = vmatprep.mubr.f32.mxu0 0.0
    %v621 = vand.u32 %v191, 4294901760
    %622 = vmatmul.mubr.f32.gmra.mrb[0].mxu0 %v621
    %v623 = vpop.f32.mrb[0].mxu0
    %v624 = vadd.f32 %v423, %v623
    %v625 = vpop.f32.mrb[0].mxu0
    %626 = vdwg.mxu0
    %627 = vmatprep.subr.mxu0 0.0
    %v628 = vand.u32 %v129, 4294901760
    %v629 = vsub.f32 %v129, %v628
    %630 = vmatpush1.msra.mxu0 %v629
    %631 = vmatprep.subr.mxu0 0.0
    %v632 = vand.u32 %v130, 4294901760
    %v633 = vsub.f32 %v130, %v632
    %634 = vmatpush1.msra.mxu0 %v633
    %635 = vmatprep.subr.mxu0 0.0
    %v636 = vand.u32 %v131, 4294901760
    %v637 = vsub.f32 %v131, %v636
    %638 = vmatpush1.msra.mxu0 %v637
    %639 = vmatprep.subr.mxu0 0.0
    %v640 = vand.u32 %v132, 4294901760
    %v641 = vsub.f32 %v132, %v640
    %642 = vmatpush1.msra.mxu0 %v641
    %643 = vmatprep.subr.mxu0 0.0
    %v644 = vand.u32 %v133, 4294901760
    %v645 = vsub.f32 %v133, %v644
    %646 = vmatpush1.msra.mxu0 %v645
    %647 = vmatprep.subr.mxu0 0.0
    %v648 = vand.u32 %v134, 4294901760
    %v649 = vsub.f32 %v134, %v648
    %650 = vmatpush1.msra.mxu0 %v649
    %651 = vmatprep.subr.mxu0 0.0
    %v652 = vand.u32 %v135, 4294901760
    %v653 = vsub.f32 %v135, %v652
    %654 = vmatpush1.msra.mxu0 %v653
    %655 = vmatprep.subr.mxu0 0.0
    %v656 = vand.u32 %v136, 4294901760
    %v657 = vsub.f32 %v136, %v656
    %658 = vmatpush1.msra.mxu0 %v657
    %659 = vmatprep.subr.mxu0 0.0
    %660 = vmatpush1.msra.mxu0 0.0
    %661 = vmatprep.subr.mxu0 0.0
    %662 = vmatpush1.msra.mxu0 0.0
    %663 = vmatprep.subr.mxu0 0.0
    %664 = vmatpush1.msra.mxu0 0.0
    %665 = vmatprep.subr.mxu0 0.0
    %666 = vmatpush1.msra.mxu0 0.0
    %667 = vmatprep.subr.mxu0 0.0
    %668 = vmatpush1.msra.mxu0 0.0
    %669 = vmatprep.subr.mxu0 0.0
    %670 = vmatpush1.msra.mxu0 0.0
    %671 = vmatprep.subr.mxu0 0.0
    %672 = vmatpush1.msra.mxu0 0.0
    %673 = vmatprep.subr.mxu0 0.0
    %674 = vmatpush1.msra.mxu0 0.0
    %675 = vmatprep.subr.mxu0 0.0
    %676 = vmatpush1.msra.mxu0 0.0
    %677 = vmatprep.subr.mxu0 0.0
    %678 = vmatpush1.msra.mxu0 0.0
    %679 = vmatprep.subr.mxu0 0.0
    %680 = vmatpush1.msra.mxu0 0.0
    %681 = vmatprep.subr.mxu0 0.0
    %682 = vmatpush1.msra.mxu0 0.0
    %683 = vmatprep.subr.mxu0 0.0
    %684 = vmatpush1.msra.mxu0 0.0
    %685 = vmatprep.subr.mxu0 0.0
    %686 = vmatpush1.msra.mxu0 0.0
    %687 = vmatprep.subr.mxu0 0.0
    %688 = vmatpush1.msra.mxu0 0.0
    %689 = vmatprep.subr.mxu0 0.0
    %690 = vmatpush1.msra.mxu0 0.0
    %691 = vmatprep.subr.mxu0 0.0
    %692 = vmatpush1.msra.mxu0 0.0
    %693 = vmatprep.subr.mxu0 0.0
    %694 = vmatpush1.msra.mxu0 0.0
    %695 = vmatprep.subr.mxu0 0.0
    %696 = vmatpush1.msra.mxu0 0.0
    %697 = vmatprep.subr.mxu0 0.0
    %698 = vmatpush1.msra.mxu0 0.0
    %699 = vmatprep.subr.mxu0 0.0
    %700 = vmatpush1.msra.mxu0 0.0
    %701 = vmatprep.subr.mxu0 0.0
    %702 = vmatpush1.msra.mxu0 0.0
    %703 = vmatprep.subr.mxu0 0.0
    %704 = vmatpush1.msra.mxu0 0.0
    %705 = vmatprep.subr.mxu0 0.0
    %706 = vmatpush1.msra.mxu0 0.0
    %707 = vmatprep.mubr.f32.mxu0 0.0
    %v708 = vand.u32 %v146, 4294901760
    %v709 = vsub.f32 %v146, %v708
    %710 = vmatmul.mubr.f32.gmra.mrb[0].mxu0 %v709
    %v711 = vpop.f32.mrb[0].mxu0
    %v712 = vadd.f32 %v534, %v711
    %v713 = vpop.f32.mrb[0].mxu0
    %714 = vmatprep.mubr.f32.mxu0 0.0
    %v715 = vand.u32 %v149, 4294901760
    %v716 = vsub.f32 %v149, %v715
    %717 = vmatmul.mubr.f32.gmra.mrb[0].mxu0 %v716
    %v718 = vpop.f32.mrb[0].mxu0
    %v719 = vadd.f32 %v540, %v718
    %v720 = vpop.f32.mrb[0].mxu0
    %721 = vmatprep.mubr.f32.mxu0 0.0
    %v722 = vand.u32 %v152, 4294901760
    %v723 = vsub.f32 %v152, %v722
    %724 = vmatmul.mubr.f32.gmra.mrb[0].mxu0 %v723
    %v725 = vpop.f32.mrb[0].mxu0
    %v726 = vadd.f32 %v546, %v725
    %v727 = vpop.f32.mrb[0].mxu0
    %728 = vmatprep.mubr.f32.mxu0 0.0
    %v729 = vand.u32 %v155, 4294901760
    %v730 = vsub.f32 %v155, %v729
    %731 = vmatmul.mubr.f32.gmra.mrb[0].mxu0 %v730
    %v732 = vpop.f32.mrb[0].mxu0
    %v733 = vadd.f32 %v552, %v732
    %v734 = vpop.f32.mrb[0].mxu0
    %735 = vmatprep.mubr.f32.mxu0 0.0
    %v736 = vand.u32 %v158, 4294901760
    %v737 = vsub.f32 %v158, %v736
    %738 = vmatmul.mubr.f32.gmra.mrb[0].mxu0 %v737
    %v739 = vpop.f32.mrb[0].mxu0
    %v740 = vadd.f32 %v558, %v739
    %v741 = vpop.f32.mrb[0].mxu0
    %742 = vmatprep.mubr.f32.mxu0 0.0
    %v743 = vand.u32 %v161, 4294901760
    %v744 = vsub.f32 %v161, %v743
    %745 = vmatmul.mubr.f32.gmra.mrb[0].mxu0 %v744
    %v746 = vpop.f32.mrb[0].mxu0
    %v747 = vadd.f32 %v564, %v746
    %v748 = vpop.f32.mrb[0].mxu0
    %749 = vmatprep.mubr.f32.mxu0 0.0
    %v750 = vand.u32 %v164, 4294901760
    %v751 = vsub.f32 %v164, %v750
    %752 = vmatmul.mubr.f32.gmra.mrb[0].mxu0 %v751
    %v753 = vpop.f32.mrb[0].mxu0
    %v754 = vadd.f32 %v570, %v753
    %v755 = vpop.f32.mrb[0].mxu0
    %756 = vmatprep.mubr.f32.mxu0 0.0
    %v757 = vand.u32 %v167, 4294901760
    %v758 = vsub.f32 %v167, %v757
    %759 = vmatmul.mubr.f32.gmra.mrb[0].mxu0 %v758
    %v760 = vpop.f32.mrb[0].mxu0
    %v761 = vadd.f32 %v576, %v760
    %v762 = vpop.f32.mrb[0].mxu0
    %763 = vmatprep.mubr.f32.mxu0 0.0
    %v764 = vand.u32 %v170, 4294901760
    %v765 = vsub.f32 %v170, %v764
    %766 = vmatmul.mubr.f32.gmra.mrb[0].mxu0 %v765
    %v767 = vpop.f32.mrb[0].mxu0
    %v768 = vadd.f32 %v582, %v767
    %v769 = vpop.f32.mrb[0].mxu0
    %770 = vmatprep.mubr.f32.mxu0 0.0
    %v771 = vand.u32 %v173, 4294901760
    %v772 = vsub.f32 %v173, %v771
    %773 = vmatmul.mubr.f32.gmra.mrb[0].mxu0 %v772
    %v774 = vpop.f32.mrb[0].mxu0
    %v775 = vadd.f32 %v588, %v774
    %v776 = vpop.f32.mrb[0].mxu0
    %777 = vmatprep.mubr.f32.mxu0 0.0
    %v778 = vand.u32 %v176, 4294901760
    %v779 = vsub.f32 %v176, %v778
    %780 = vmatmul.mubr.f32.gmra.mrb[0].mxu0 %v779
    %v781 = vpop.f32.mrb[0].mxu0
    %v782 = vadd.f32 %v594, %v781
    %v783 = vpop.f32.mrb[0].mxu0
    %784 = vmatprep.mubr.f32.mxu0 0.0
    %v785 = vand.u32 %v179, 4294901760
    %v786 = vsub.f32 %v179, %v785
    %787 = vmatmul.mubr.f32.gmra.mrb[0].mxu0 %v786
    %v788 = vpop.f32.mrb[0].mxu0
    %v789 = vadd.f32 %v600, %v788
    %v790 = vpop.f32.mrb[0].mxu0
    %791 = vmatprep.mubr.f32.mxu0 0.0
    %v792 = vand.u32 %v182, 4294901760
    %v793 = vsub.f32 %v182, %v792
    %794 = vmatmul.mubr.f32.gmra.mrb[0].mxu0 %v793
    %v795 = vpop.f32.mrb[0].mxu0
    %v796 = vadd.f32 %v606, %v795
    %v797 = vpop.f32.mrb[0].mxu0
    %798 = vmatprep.mubr.f32.mxu0 0.0
    %v799 = vand.u32 %v185, 4294901760
    %v800 = vsub.f32 %v185, %v799
    %801 = vmatmul.mubr.f32.gmra.mrb[0].mxu0 %v800
    %v802 = vpop.f32.mrb[0].mxu0
    %v803 = vadd.f32 %v612, %v802
    %v804 = vpop.f32.mrb[0].mxu0
    %805 = vmatprep.mubr.f32.mxu0 0.0
    %v806 = vand.u32 %v188, 4294901760
    %v807 = vsub.f32 %v188, %v806
    %808 = vmatmul.mubr.f32.gmra.mrb[0].mxu0 %v807
    %v809 = vpop.f32.mrb[0].mxu0
    %v810 = vadd.f32 %v618, %v809
    %v811 = vpop.f32.mrb[0].mxu0
    %812 = vmatprep.mubr.f32.mxu0 0.0
    %v813 = vand.u32 %v191, 4294901760
    %v814 = vsub.f32 %v191, %v813
    %815 = vmatmul.mubr.f32.gmra.mrb[0].mxu0 %v814
    %v816 = vpop.f32.mrb[0].mxu0
    %v817 = vadd.f32 %v624, %v816
    %v818 = vpop.f32.mrb[0].mxu0
    %819 = vdwg.mxu0
    %820 = vmatprep.subr.mxu0 0.0
    %v821 = vand.u32 %v129, 4294901760
    %822 = vmatpush1.msra.mxu0 %v821
    %823 = vmatprep.subr.mxu0 0.0
    %v824 = vand.u32 %v130, 4294901760
    %825 = vmatpush1.msra.mxu0 %v824
    %826 = vmatprep.subr.mxu0 0.0
    %v827 = vand.u32 %v131, 4294901760
    %828 = vmatpush1.msra.mxu0 %v827
    %829 = vmatprep.subr.mxu0 0.0
    %v830 = vand.u32 %v132, 4294901760
    %831 = vmatpush1.msra.mxu0 %v830
    %832 = vmatprep.subr.mxu0 0.0
    %v833 = vand.u32 %v133, 4294901760
    %834 = vmatpush1.msra.mxu0 %v833
    %835 = vmatprep.subr.mxu0 0.0
    %v836 = vand.u32 %v134, 4294901760
    %837 = vmatpush1.msra.mxu0 %v836
    %838 = vmatprep.subr.mxu0 0.0
    %v839 = vand.u32 %v135, 4294901760
    %840 = vmatpush1.msra.mxu0 %v839
    %841 = vmatprep.subr.mxu0 0.0
    %v842 = vand.u32 %v136, 4294901760
    %843 = vmatpush1.msra.mxu0 %v842
    %844 = vmatprep.subr.mxu0 0.0
    %845 = vmatpush1.msra.mxu0 0.0
    %846 = vmatprep.subr.mxu0 0.0
    %847 = vmatpush1.msra.mxu0 0.0
    %848 = vmatprep.subr.mxu0 0.0
    %849 = vmatpush1.msra.mxu0 0.0
    %850 = vmatprep.subr.mxu0 0.0
    %851 = vmatpush1.msra.mxu0 0.0
    %852 = vmatprep.subr.mxu0 0.0
    %853 = vmatpush1.msra.mxu0 0.0
    %854 = vmatprep.subr.mxu0 0.0
    %855 = vmatpush1.msra.mxu0 0.0
    %856 = vmatprep.subr.mxu0 0.0
    %857 = vmatpush1.msra.mxu0 0.0
    %858 = vmatprep.subr.mxu0 0.0
    %859 = vmatpush1.msra.mxu0 0.0
    %860 = vmatprep.subr.mxu0 0.0
    %861 = vmatpush1.msra.mxu0 0.0
    %862 = vmatprep.subr.mxu0 0.0
    %863 = vmatpush1.msra.mxu0 0.0
    %864 = vmatprep.subr.mxu0 0.0
    %865 = vmatpush1.msra.mxu0 0.0
    %866 = vmatprep.subr.mxu0 0.0
    %867 = vmatpush1.msra.mxu0 0.0
    %868 = vmatprep.subr.mxu0 0.0
    %869 = vmatpush1.msra.mxu0 0.0
    %870 = vmatprep.subr.mxu0 0.0
    %871 = vmatpush1.msra.mxu0 0.0
    %872 = vmatprep.subr.mxu0 0.0
    %873 = vmatpush1.msra.mxu0 0.0
    %874 = vmatprep.subr.mxu0 0.0
    %875 = vmatpush1.msra.mxu0 0.0
    %876 = vmatprep.subr.mxu0 0.0
    %877 = vmatpush1.msra.mxu0 0.0
    %878 = vmatprep.subr.mxu0 0.0
    %879 = vmatpush1.msra.mxu0 0.0
    %880 = vmatprep.subr.mxu0 0.0
    %881 = vmatpush1.msra.mxu0 0.0
    %882 = vmatprep.subr.mxu0 0.0
    %883 = vmatpush1.msra.mxu0 0.0
    %884 = vmatprep.subr.mxu0 0.0
    %885 = vmatpush1.msra.mxu0 0.0
    %886 = vmatprep.subr.mxu0 0.0
    %887 = vmatpush1.msra.mxu0 0.0
    %888 = vmatprep.subr.mxu0 0.0
    %889 = vmatpush1.msra.mxu0 0.0
    %890 = vmatprep.subr.mxu0 0.0
    %891 = vmatpush1.msra.mxu0 0.0
    %892 = vmatprep.mubr.f32.mxu0 0.0
    %v893 = vand.u32 %v146, 4294901760
    %v894 = vsub.f32 %v146, %v893
    %v895 = vand.u32 %v894, 4294901760
    %896 = vmatmul.mubr.f32.gmra.mrb[0].mxu0 %v895
    %v897 = vpop.f32.mrb[0].mxu0
    %v898 = vadd.f32 %v712, %v897
    %v899 = vpop.f32.mrb[0].mxu0
    %900 = vmatprep.mubr.f32.mxu0 0.0
    %v901 = vand.u32 %v149, 4294901760
    %v902 = vsub.f32 %v149, %v901
    %v903 = vand.u32 %v902, 4294901760
    %904 = vmatmul.mubr.f32.gmra.mrb[0].mxu0 %v903
    %v905 = vpop.f32.mrb[0].mxu0
    %v906 = vadd.f32 %v719, %v905
    %v907 = vpop.f32.mrb[0].mxu0
    %908 = vmatprep.mubr.f32.mxu0 0.0
    %v909 = vand.u32 %v152, 4294901760
    %v910 = vsub.f32 %v152, %v909
    %v911 = vand.u32 %v910, 4294901760
    %912 = vmatmul.mubr.f32.gmra.mrb[0].mxu0 %v911
    %v913 = vpop.f32.mrb[0].mxu0
    %v914 = vadd.f32 %v726, %v913
    %v915 = vpop.f32.mrb[0].mxu0
    %916 = vmatprep.mubr.f32.mxu0 0.0
    %v917 = vand.u32 %v155, 4294901760
    %v918 = vsub.f32 %v155, %v917
    %v919 = vand.u32 %v918, 4294901760
    %920 = vmatmul.mubr.f32.gmra.mrb[0].mxu0 %v919
    %v921 = vpop.f32.mrb[0].mxu0
    %v922 = vadd.f32 %v733, %v921
    %v923 = vpop.f32.mrb[0].mxu0
    %924 = vmatprep.mubr.f32.mxu0 0.0
    %v925 = vand.u32 %v158, 4294901760
    %v926 = vsub.f32 %v158, %v925
    %v927 = vand.u32 %v926, 4294901760
    %928 = vmatmul.mubr.f32.gmra.mrb[0].mxu0 %v927
    %v929 = vpop.f32.mrb[0].mxu0
    %v930 = vadd.f32 %v740, %v929
    %v931 = vpop.f32.mrb[0].mxu0
    %932 = vmatprep.mubr.f32.mxu0 0.0
    %v933 = vand.u32 %v161, 4294901760
    %v934 = vsub.f32 %v161, %v933
    %v935 = vand.u32 %v934, 4294901760
    %936 = vmatmul.mubr.f32.gmra.mrb[0].mxu0 %v935
    %v937 = vpop.f32.mrb[0].mxu0
    %v938 = vadd.f32 %v747, %v937
    %v939 = vpop.f32.mrb[0].mxu0
    %940 = vmatprep.mubr.f32.mxu0 0.0
    %v941 = vand.u32 %v164, 4294901760
    %v942 = vsub.f32 %v164, %v941
    %v943 = vand.u32 %v942, 4294901760
    %944 = vmatmul.mubr.f32.gmra.mrb[0].mxu0 %v943
    %v945 = vpop.f32.mrb[0].mxu0
    %v946 = vadd.f32 %v754, %v945
    %v947 = vpop.f32.mrb[0].mxu0
    %948 = vmatprep.mubr.f32.mxu0 0.0
    %v949 = vand.u32 %v167, 4294901760
    %v950 = vsub.f32 %v167, %v949
    %v951 = vand.u32 %v950, 4294901760
    %952 = vmatmul.mubr.f32.gmra.mrb[0].mxu0 %v951
    %v953 = vpop.f32.mrb[0].mxu0
    %v954 = vadd.f32 %v761, %v953
    %v955 = vpop.f32.mrb[0].mxu0
    %956 = vmatprep.mubr.f32.mxu0 0.0
    %v957 = vand.u32 %v170, 4294901760
    %v958 = vsub.f32 %v170, %v957
    %v959 = vand.u32 %v958, 4294901760
    %960 = vmatmul.mubr.f32.gmra.mrb[0].mxu0 %v959
    %v961 = vpop.f32.mrb[0].mxu0
    %v962 = vadd.f32 %v768, %v961
    %v963 = vpop.f32.mrb[0].mxu0
    %964 = vmatprep.mubr.f32.mxu0 0.0
    %v965 = vand.u32 %v173, 4294901760
    %v966 = vsub.f32 %v173, %v965
    %v967 = vand.u32 %v966, 4294901760
    %968 = vmatmul.mubr.f32.gmra.mrb[0].mxu0 %v967
    %v969 = vpop.f32.mrb[0].mxu0
    %v970 = vadd.f32 %v775, %v969
    %v971 = vpop.f32.mrb[0].mxu0
    %972 = vmatprep.mubr.f32.mxu0 0.0
    %v973 = vand.u32 %v176, 4294901760
    %v974 = vsub.f32 %v176, %v973
    %v975 = vand.u32 %v974, 4294901760
    %976 = vmatmul.mubr.f32.gmra.mrb[0].mxu0 %v975
    %v977 = vpop.f32.mrb[0].mxu0
    %v978 = vadd.f32 %v782, %v977
    %v979 = vpop.f32.mrb[0].mxu0
    %980 = vmatprep.mubr.f32.mxu0 0.0
    %v981 = vand.u32 %v179, 4294901760
    %v982 = vsub.f32 %v179, %v981
    %v983 = vand.u32 %v982, 4294901760
    %984 = vmatmul.mubr.f32.gmra.mrb[0].mxu0 %v983
    %v985 = vpop.f32.mrb[0].mxu0
    %v986 = vadd.f32 %v789, %v985
    %v987 = vpop.f32.mrb[0].mxu0
    %988 = vmatprep.mubr.f32.mxu0 0.0
    %v989 = vand.u32 %v182, 4294901760
    %v990 = vsub.f32 %v182, %v989
    %v991 = vand.u32 %v990, 4294901760
    %992 = vmatmul.mubr.f32.gmra.mrb[0].mxu0 %v991
    %v993 = vpop.f32.mrb[0].mxu0
    %v994 = vadd.f32 %v796, %v993
    %v995 = vpop.f32.mrb[0].mxu0
    %996 = vmatprep.mubr.f32.mxu0 0.0
    %v997 = vand.u32 %v185, 4294901760
    %v998 = vsub.f32 %v185, %v997
    %v999 = vand.u32 %v998, 4294901760
    %1000 = vmatmul.mubr.f32.gmra.mrb[0].mxu0 %v999
    %v1001 = vpop.f32.mrb[0].mxu0
    %v1002 = vadd.f32 %v803, %v1001
    %v1003 = vpop.f32.mrb[0].mxu0
    %1004 = vmatprep.mubr.f32.mxu0 0.0
    %v1005 = vand.u32 %v188, 4294901760
    %v1006 = vsub.f32 %v188, %v1005
    %v1007 = vand.u32 %v1006, 4294901760
    %1008 = vmatmul.mubr.f32.gmra.mrb[0].mxu0 %v1007
    %v1009 = vpop.f32.mrb[0].mxu0
    %v1010 = vadd.f32 %v810, %v1009
    %v1011 = vpop.f32.mrb[0].mxu0
    %1012 = vmatprep.mubr.f32.mxu0 0.0
    %v1013 = vand.u32 %v191, 4294901760
    %v1014 = vsub.f32 %v191, %v1013
    %v1015 = vand.u32 %v1014, 4294901760
    %1016 = vmatmul.mubr.f32.gmra.mrb[0].mxu0 %v1015
    %v1017 = vpop.f32.mrb[0].mxu0
    %v1018 = vadd.f32 %v817, %v1017
    %v1019 = vpop.f32.mrb[0].mxu0
    %1020 = vdwg.mxu0
    %1021 = vmatprep.subr.mxu0 0.0
    %v1022 = vand.u32 %v129, 4294901760
    %v1023 = vsub.f32 %v129, %v1022
    %v1024 = vand.u32 %v1023, 4294901760
    %1025 = vmatpush1.msra.mxu0 %v1024
    %1026 = vmatprep.subr.mxu0 0.0
    %v1027 = vand.u32 %v130, 4294901760
    %v1028 = vsub.f32 %v130, %v1027
    %v1029 = vand.u32 %v1028, 4294901760
    %1030 = vmatpush1.msra.mxu0 %v1029
    %1031 = vmatprep.subr.mxu0 0.0
    %v1032 = vand.u32 %v131, 4294901760
    %v1033 = vsub.f32 %v131, %v1032
    %v1034 = vand.u32 %v1033, 4294901760
    %1035 = vmatpush1.msra.mxu0 %v1034
    %1036 = vmatprep.subr.mxu0 0.0
    %v1037 = vand.u32 %v132, 4294901760
    %v1038 = vsub.f32 %v132, %v1037
    %v1039 = vand.u32 %v1038, 4294901760
    %1040 = vmatpush1.msra.mxu0 %v1039
    %1041 = vmatprep.subr.mxu0 0.0
    %v1042 = vand.u32 %v133, 4294901760
    %v1043 = vsub.f32 %v133, %v1042
    %v1044 = vand.u32 %v1043, 4294901760
    %1045 = vmatpush1.msra.mxu0 %v1044
    %1046 = vmatprep.subr.mxu0 0.0
    %v1047 = vand.u32 %v134, 4294901760
    %v1048 = vsub.f32 %v134, %v1047
    %v1049 = vand.u32 %v1048, 4294901760
    %1050 = vmatpush1.msra.mxu0 %v1049
    %1051 = vmatprep.subr.mxu0 0.0
    %v1052 = vand.u32 %v135, 4294901760
    %v1053 = vsub.f32 %v135, %v1052
    %v1054 = vand.u32 %v1053, 4294901760
    %1055 = vmatpush1.msra.mxu0 %v1054
    %1056 = vmatprep.subr.mxu0 0.0
    %v1057 = vand.u32 %v136, 4294901760
    %v1058 = vsub.f32 %v136, %v1057
    %v1059 = vand.u32 %v1058, 4294901760
    %1060 = vmatpush1.msra.mxu0 %v1059
    %1061 = vmatprep.subr.mxu0 0.0
    %1062 = vmatpush1.msra.mxu0 0.0
    %1063 = vmatprep.subr.mxu0 0.0
    %1064 = vmatpush1.msra.mxu0 0.0
    %1065 = vmatprep.subr.mxu0 0.0
    %1066 = vmatpush1.msra.mxu0 0.0
    %1067 = vmatprep.subr.mxu0 0.0
    %1068 = vmatpush1.msra.mxu0 0.0
    %1069 = vmatprep.subr.mxu0 0.0
    %1070 = vmatpush1.msra.mxu0 0.0
    %1071 = vmatprep.subr.mxu0 0.0
    %1072 = vmatpush1.msra.mxu0 0.0
    %1073 = vmatprep.subr.mxu0 0.0
    %1074 = vmatpush1.msra.mxu0 0.0
    %1075 = vmatprep.subr.mxu0 0.0
    %1076 = vmatpush1.msra.mxu0 0.0
    %1077 = vmatprep.subr.mxu0 0.0
    %1078 = vmatpush1.msra.mxu0 0.0
    %1079 = vmatprep.subr.mxu0 0.0
    %1080 = vmatpush1.msra.mxu0 0.0
    %1081 = vmatprep.subr.mxu0 0.0
    %1082 = vmatpush1.msra.mxu0 0.0
    %1083 = vmatprep.subr.mxu0 0.0
    %1084 = vmatpush1.msra.mxu0 0.0
    %1085 = vmatprep.subr.mxu0 0.0
    %1086 = vmatpush1.msra.mxu0 0.0
    %1087 = vmatprep.subr.mxu0 0.0
    %1088 = vmatpush1.msra.mxu0 0.0
    %1089 = vmatprep.subr.mxu0 0.0
    %1090 = vmatpush1.msra.mxu0 0.0
    %1091 = vmatprep.subr.mxu0 0.0
    %1092 = vmatpush1.msra.mxu0 0.0
    %1093 = vmatprep.subr.mxu0 0.0
    %1094 = vmatpush1.msra.mxu0 0.0
    %1095 = vmatprep.subr.mxu0 0.0
    %1096 = vmatpush1.msra.mxu0 0.0
    %1097 = vmatprep.subr.mxu0 0.0
    %1098 = vmatpush1.msra.mxu0 0.0
    %1099 = vmatprep.subr.mxu0 0.0
    %1100 = vmatpush1.msra.mxu0 0.0
    %1101 = vmatprep.subr.mxu0 0.0
    %1102 = vmatpush1.msra.mxu0 0.0
    %1103 = vmatprep.subr.mxu0 0.0
    %1104 = vmatpush1.msra.mxu0 0.0
    %1105 = vmatprep.subr.mxu0 0.0
    %1106 = vmatpush1.msra.mxu0 0.0
    %1107 = vmatprep.subr.mxu0 0.0
    %1108 = vmatpush1.msra.mxu0 0.0
    %1109 = vmatprep.mubr.f32.mxu0 0.0
    %v1110 = vand.u32 %v146, 4294901760
    %1111 = vmatmul.mubr.f32.gmra.mrb[0].mxu0 %v1110
    %v1112 = vpop.f32.mrb[0].mxu0
    %v1113 = vadd.f32 %v898, %v1112
    %v1114 = vpop.f32.mrb[0].mxu0
    %1115 = vmatprep.mubr.f32.mxu0 0.0
    %v1116 = vand.u32 %v149, 4294901760
    %1117 = vmatmul.mubr.f32.gmra.mrb[0].mxu0 %v1116
    %v1118 = vpop.f32.mrb[0].mxu0
    %v1119 = vadd.f32 %v906, %v1118
    %v1120 = vpop.f32.mrb[0].mxu0
    %1121 = vmatprep.mubr.f32.mxu0 0.0
    %v1122 = vand.u32 %v152, 4294901760
    %1123 = vmatmul.mubr.f32.gmra.mrb[0].mxu0 %v1122
    %v1124 = vpop.f32.mrb[0].mxu0
    %v1125 = vadd.f32 %v914, %v1124
    %v1126 = vpop.f32.mrb[0].mxu0
    %1127 = vmatprep.mubr.f32.mxu0 0.0
    %v1128 = vand.u32 %v155, 4294901760
    %1129 = vmatmul.mubr.f32.gmra.mrb[0].mxu0 %v1128
    %v1130 = vpop.f32.mrb[0].mxu0
    %v1131 = vadd.f32 %v922, %v1130
    %v1132 = vpop.f32.mrb[0].mxu0
    %1133 = vmatprep.mubr.f32.mxu0 0.0
    %v1134 = vand.u32 %v158, 4294901760
    %1135 = vmatmul.mubr.f32.gmra.mrb[0].mxu0 %v1134
    %v1136 = vpop.f32.mrb[0].mxu0
    %v1137 = vadd.f32 %v930, %v1136
    %v1138 = vpop.f32.mrb[0].mxu0
    %1139 = vmatprep.mubr.f32.mxu0 0.0
    %v1140 = vand.u32 %v161, 4294901760
    %1141 = vmatmul.mubr.f32.gmra.mrb[0].mxu0 %v1140
    %v1142 = vpop.f32.mrb[0].mxu0
    %v1143 = vadd.f32 %v938, %v1142
    %v1144 = vpop.f32.mrb[0].mxu0
    %1145 = vmatprep.mubr.f32.mxu0 0.0
    %v1146 = vand.u32 %v164, 4294901760
    %1147 = vmatmul.mubr.f32.gmra.mrb[0].mxu0 %v1146
    %v1148 = vpop.f32.mrb[0].mxu0
    %v1149 = vadd.f32 %v946, %v1148
    %v1150 = vpop.f32.mrb[0].mxu0
    %1151 = vmatprep.mubr.f32.mxu0 0.0
    %v1152 = vand.u32 %v167, 4294901760
    %1153 = vmatmul.mubr.f32.gmra.mrb[0].mxu0 %v1152
    %v1154 = vpop.f32.mrb[0].mxu0
    %v1155 = vadd.f32 %v954, %v1154
    %v1156 = vpop.f32.mrb[0].mxu0
    %1157 = vmatprep.mubr.f32.mxu0 0.0
    %v1158 = vand.u32 %v170, 4294901760
    %1159 = vmatmul.mubr.f32.gmra.mrb[0].mxu0 %v1158
    %v1160 = vpop.f32.mrb[0].mxu0
    %v1161 = vadd.f32 %v962, %v1160
    %v1162 = vpop.f32.mrb[0].mxu0
    %1163 = vmatprep.mubr.f32.mxu0 0.0
    %v1164 = vand.u32 %v173, 4294901760
    %1165 = vmatmul.mubr.f32.gmra.mrb[0].mxu0 %v1164
    %v1166 = vpop.f32.mrb[0].mxu0
    %v1167 = vadd.f32 %v970, %v1166
    %v1168 = vpop.f32.mrb[0].mxu0
    %1169 = vmatprep.mubr.f32.mxu0 0.0
    %v1170 = vand.u32 %v176, 4294901760
    %1171 = vmatmul.mubr.f32.gmra.mrb[0].mxu0 %v1170
    %v1172 = vpop.f32.mrb[0].mxu0
    %v1173 = vadd.f32 %v978, %v1172
    %v1174 = vpop.f32.mrb[0].mxu0
    %1175 = vmatprep.mubr.f32.mxu0 0.0
    %v1176 = vand.u32 %v179, 4294901760
    %1177 = vmatmul.mubr.f32.gmra.mrb[0].mxu0 %v1176
    %v1178 = vpop.f32.mrb[0].mxu0
    %v1179 = vadd.f32 %v986, %v1178
    %v1180 = vpop.f32.mrb[0].mxu0
    %1181 = vmatprep.mubr.f32.mxu0 0.0
    %v1182 = vand.u32 %v182, 4294901760
    %1183 = vmatmul.mubr.f32.gmra.mrb[0].mxu0 %v1182
    %v1184 = vpop.f32.mrb[0].mxu0
    %v1185 = vadd.f32 %v994, %v1184
    %v1186 = vpop.f32.mrb[0].mxu0
    %1187 = vmatprep.mubr.f32.mxu0 0.0
    %v1188 = vand.u32 %v185, 4294901760
    %1189 = vmatmul.mubr.f32.gmra.mrb[0].mxu0 %v1188
    %v1190 = vpop.f32.mrb[0].mxu0
    %v1191 = vadd.f32 %v1002, %v1190
    %v1192 = vpop.f32.mrb[0].mxu0
    %1193 = vmatprep.mubr.f32.mxu0 0.0
    %v1194 = vand.u32 %v188, 4294901760
    %1195 = vmatmul.mubr.f32.gmra.mrb[0].mxu0 %v1194
    %v1196 = vpop.f32.mrb[0].mxu0
    %v1197 = vadd.f32 %v1010, %v1196
    %v1198 = vpop.f32.mrb[0].mxu0
    %1199 = vmatprep.mubr.f32.mxu0 0.0
    %v1200 = vand.u32 %v191, 4294901760
    %1201 = vmatmul.mubr.f32.gmra.mrb[0].mxu0 %v1200
    %v1202 = vpop.f32.mrb[0].mxu0
    %v1203 = vadd.f32 %v1018, %v1202
    %v1204 = vpop.f32.mrb[0].mxu0
    %1205 = vdwg.mxu0
    %1206 = vmatprep.subr.mxu0 0.0
    %v1207 = vand.u32 %v129, 4294901760
    %1208 = vmatpush1.msra.mxu0 %v1207
    %1209 = vmatprep.subr.mxu0 0.0
    %v1210 = vand.u32 %v130, 4294901760
    %1211 = vmatpush1.msra.mxu0 %v1210
    %1212 = vmatprep.subr.mxu0 0.0
    %v1213 = vand.u32 %v131, 4294901760
    %1214 = vmatpush1.msra.mxu0 %v1213
    %1215 = vmatprep.subr.mxu0 0.0
    %v1216 = vand.u32 %v132, 4294901760
    %1217 = vmatpush1.msra.mxu0 %v1216
    %1218 = vmatprep.subr.mxu0 0.0
    %v1219 = vand.u32 %v133, 4294901760
    %1220 = vmatpush1.msra.mxu0 %v1219
    %1221 = vmatprep.subr.mxu0 0.0
    %v1222 = vand.u32 %v134, 4294901760
    %1223 = vmatpush1.msra.mxu0 %v1222
    %1224 = vmatprep.subr.mxu0 0.0
    %v1225 = vand.u32 %v135, 4294901760
    %1226 = vmatpush1.msra.mxu0 %v1225
    %1227 = vmatprep.subr.mxu0 0.0
    %v1228 = vand.u32 %v136, 4294901760
    %1229 = vmatpush1.msra.mxu0 %v1228
    %1230 = vmatprep.subr.mxu0 0.0
    %1231 = vmatpush1.msra.mxu0 0.0
    %1232 = vmatprep.subr.mxu0 0.0
    %1233 = vmatpush1.msra.mxu0 0.0
    %1234 = vmatprep.subr.mxu0 0.0
    %1235 = vmatpush1.msra.mxu0 0.0
    %1236 = vmatprep.subr.mxu0 0.0
    %1237 = vmatpush1.msra.mxu0 0.0
    %1238 = vmatprep.subr.mxu0 0.0
    %1239 = vmatpush1.msra.mxu0 0.0
    %1240 = vmatprep.subr.mxu0 0.0
    %1241 = vmatpush1.msra.mxu0 0.0
    %1242 = vmatprep.subr.mxu0 0.0
    %1243 = vmatpush1.msra.mxu0 0.0
    %1244 = vmatprep.subr.mxu0 0.0
    %1245 = vmatpush1.msra.mxu0 0.0
    %1246 = vmatprep.subr.mxu0 0.0
    %1247 = vmatpush1.msra.mxu0 0.0
    %1248 = vmatprep.subr.mxu0 0.0
    %1249 = vmatpush1.msra.mxu0 0.0
    %1250 = vmatprep.subr.mxu0 0.0
    %1251 = vmatpush1.msra.mxu0 0.0
    %1252 = vmatprep.subr.mxu0 0.0
    %1253 = vmatpush1.msra.mxu0 0.0
    %1254 = vmatprep.subr.mxu0 0.0
    %1255 = vmatpush1.msra.mxu0 0.0
    %1256 = vmatprep.subr.mxu0 0.0
    %1257 = vmatpush1.msra.mxu0 0.0
    %1258 = vmatprep.subr.mxu0 0.0
    %1259 = vmatpush1.msra.mxu0 0.0
    %1260 = vmatprep.subr.mxu0 0.0
    %1261 = vmatpush1.msra.mxu0 0.0
    %1262 = vmatprep.subr.mxu0 0.0
    %1263 = vmatpush1.msra.mxu0 0.0
    %1264 = vmatprep.subr.mxu0 0.0
    %1265 = vmatpush1.msra.mxu0 0.0
    %1266 = vmatprep.subr.mxu0 0.0
    %1267 = vmatpush1.msra.mxu0 0.0
    %1268 = vmatprep.subr.mxu0 0.0
    %1269 = vmatpush1.msra.mxu0 0.0
    %1270 = vmatprep.subr.mxu0 0.0
    %1271 = vmatpush1.msra.mxu0 0.0
    %1272 = vmatprep.subr.mxu0 0.0
    %1273 = vmatpush1.msra.mxu0 0.0
    %1274 = vmatprep.subr.mxu0 0.0
    %1275 = vmatpush1.msra.mxu0 0.0
    %1276 = vmatprep.subr.mxu0 0.0
    %1277 = vmatpush1.msra.mxu0 0.0
    %1278 = vmatprep.mubr.f32.mxu0 0.0
    %v1279 = vand.u32 %v146, 4294901760
    %1280 = vmatmul.mubr.f32.gmra.mrb[0].mxu0 %v1279
    %v1281 = vpop.f32.mrb[0].mxu0
    %v1282 = vadd.f32 %v1113, %v1281
    %v1283 = vpop.f32.mrb[0].mxu0
    %1284 = vmatprep.mubr.f32.mxu0 0.0
    %v1285 = vand.u32 %v149, 4294901760
    %1286 = vmatmul.mubr.f32.gmra.mrb[0].mxu0 %v1285
    %v1287 = vpop.f32.mrb[0].mxu0
    %v1288 = vadd.f32 %v1119, %v1287
    %v1289 = vpop.f32.mrb[0].mxu0
    %1290 = vmatprep.mubr.f32.mxu0 0.0
    %v1291 = vand.u32 %v152, 4294901760
    %1292 = vmatmul.mubr.f32.gmra.mrb[0].mxu0 %v1291
    %v1293 = vpop.f32.mrb[0].mxu0
    %v1294 = vadd.f32 %v1125, %v1293
    %v1295 = vpop.f32.mrb[0].mxu0
    %1296 = vmatprep.mubr.f32.mxu0 0.0
    %v1297 = vand.u32 %v155, 4294901760
    %1298 = vmatmul.mubr.f32.gmra.mrb[0].mxu0 %v1297
    %v1299 = vpop.f32.mrb[0].mxu0
    %v1300 = vadd.f32 %v1131, %v1299
    %v1301 = vpop.f32.mrb[0].mxu0
    %1302 = vmatprep.mubr.f32.mxu0 0.0
    %v1303 = vand.u32 %v158, 4294901760
    %1304 = vmatmul.mubr.f32.gmra.mrb[0].mxu0 %v1303
    %v1305 = vpop.f32.mrb[0].mxu0
    %v1306 = vadd.f32 %v1137, %v1305
    %v1307 = vpop.f32.mrb[0].mxu0
    %1308 = vmatprep.mubr.f32.mxu0 0.0
    %v1309 = vand.u32 %v161, 4294901760
    %1310 = vmatmul.mubr.f32.gmra.mrb[0].mxu0 %v1309
    %v1311 = vpop.f32.mrb[0].mxu0
    %v1312 = vadd.f32 %v1143, %v1311
    %v1313 = vpop.f32.mrb[0].mxu0
    %1314 = vmatprep.mubr.f32.mxu0 0.0
    %v1315 = vand.u32 %v164, 4294901760
    %1316 = vmatmul.mubr.f32.gmra.mrb[0].mxu0 %v1315
    %v1317 = vpop.f32.mrb[0].mxu0
    %v1318 = vadd.f32 %v1149, %v1317
    %v1319 = vpop.f32.mrb[0].mxu0
    %1320 = vmatprep.mubr.f32.mxu0 0.0
    %v1321 = vand.u32 %v167, 4294901760
    %1322 = vmatmul.mubr.f32.gmra.mrb[0].mxu0 %v1321
    %v1323 = vpop.f32.mrb[0].mxu0
    %v1324 = vadd.f32 %v1155, %v1323
    %v1325 = vpop.f32.mrb[0].mxu0
    %1326 = vmatprep.mubr.f32.mxu0 0.0
    %v1327 = vand.u32 %v170, 4294901760
    %1328 = vmatmul.mubr.f32.gmra.mrb[0].mxu0 %v1327
    %v1329 = vpop.f32.mrb[0].mxu0
    %v1330 = vadd.f32 %v1161, %v1329
    %v1331 = vpop.f32.mrb[0].mxu0
    %1332 = vmatprep.mubr.f32.mxu0 0.0
    %v1333 = vand.u32 %v173, 4294901760
    %1334 = vmatmul.mubr.f32.gmra.mrb[0].mxu0 %v1333
    %v1335 = vpop.f32.mrb[0].mxu0
    %v1336 = vadd.f32 %v1167, %v1335
    %v1337 = vpop.f32.mrb[0].mxu0
    %1338 = vmatprep.mubr.f32.mxu0 0.0
    %v1339 = vand.u32 %v176, 4294901760
    %1340 = vmatmul.mubr.f32.gmra.mrb[0].mxu0 %v1339
    %v1341 = vpop.f32.mrb[0].mxu0
    %v1342 = vadd.f32 %v1173, %v1341
    %v1343 = vpop.f32.mrb[0].mxu0
    %1344 = vmatprep.mubr.f32.mxu0 0.0
    %v1345 = vand.u32 %v179, 4294901760
    %1346 = vmatmul.mubr.f32.gmra.mrb[0].mxu0 %v1345
    %v1347 = vpop.f32.mrb[0].mxu0
    %v1348 = vadd.f32 %v1179, %v1347
    %v1349 = vpop.f32.mrb[0].mxu0
    %1350 = vmatprep.mubr.f32.mxu0 0.0
    %v1351 = vand.u32 %v182, 4294901760
    %1352 = vmatmul.mubr.f32.gmra.mrb[0].mxu0 %v1351
    %v1353 = vpop.f32.mrb[0].mxu0
    %v1354 = vadd.f32 %v1185, %v1353
    %v1355 = vpop.f32.mrb[0].mxu0
    %1356 = vmatprep.mubr.f32.mxu0 0.0
    %v1357 = vand.u32 %v185, 4294901760
    %1358 = vmatmul.mubr.f32.gmra.mrb[0].mxu0 %v1357
    %v1359 = vpop.f32.mrb[0].mxu0
    %v1360 = vadd.f32 %v1191, %v1359
    %v1361 = vpop.f32.mrb[0].mxu0
    %1362 = vmatprep.mubr.f32.mxu0 0.0
    %v1363 = vand.u32 %v188, 4294901760
    %1364 = vmatmul.mubr.f32.gmra.mrb[0].mxu0 %v1363
    %v1365 = vpop.f32.mrb[0].mxu0
    %v1366 = vadd.f32 %v1197, %v1365
    %v1367 = vpop.f32.mrb[0].mxu0
    %1368 = vmatprep.mubr.f32.mxu0 0.0
    %v1369 = vand.u32 %v191, 4294901760
    %1370 = vmatmul.mubr.f32.gmra.mrb[0].mxu0 %v1369
    %v1371 = vpop.f32.mrb[0].mxu0
    %v1372 = vadd.f32 %v1203, %v1371
    %v1373 = vpop.f32.mrb[0].mxu0
    %1374 = vdwg.mxu0
    %1375 = vst [vmem:[#allocation2] sm:$0xff] %v1282
    %1376 = vst [vmem:[#allocation2 + $0x8] sm:$0xff] %v1288
    %1377 = vst [vmem:[#allocation2 + $0x10] sm:$0xff] %v1294
    %1378 = vst [vmem:[#allocation2 + $0x18] sm:$0xff] %v1300
    %1379 = vst [vmem:[#allocation2 + $0x20] sm:$0xff] %v1306
    %1380 = vst [vmem:[#allocation2 + $0x28] sm:$0xff] %v1312
    %1381 = vst [vmem:[#allocation2 + $0x30] sm:$0xff] %v1318
    %1382 = vst [vmem:[#allocation2 + $0x38] sm:$0xff] %v1324
    %1383 = vst [vmem:[#allocation2 + $0x40] sm:$0xff] %v1330
    %1384 = vst [vmem:[#allocation2 + $0x48] sm:$0xff] %v1336
    %1385 = vst [vmem:[#allocation2 + $0x50] sm:$0xff] %v1342
    %1386 = vst [vmem:[#allocation2 + $0x58] sm:$0xff] %v1348
    %1387 = vst [vmem:[#allocation2 + $0x60] sm:$0xff] %v1354
    %1388 = vst [vmem:[#allocation2 + $0x68] sm:$0xff] %v1360
    %1389 = vst [vmem:[#allocation2 + $0x70] sm:$0xff] %v1366
    %1390 = vst [vmem:[#allocation2 + $0x78] sm:$0xff] %v1372
    // Predicated region
    $region14: #{tpu_custom_call.1} parent=1 // pred_check
      _
    $region15: #{tpu_custom_call.1} parent=1 // pred_check_branch
      %1392 = sbr.rel (0) target = $region17
    $region16: #{tpu_custom_call.1} parent=1 // pred_region
      %s1394 = ssub.s32 2048, 2048
      %1395 = vsyncadd [#allocation3], %s1394
      %s1396 = sshll.u32 [#allocation2], 4
      %s1397 = int_to_ptr.vmem [resolvable:$true] %s1396
      %1402 = dma.vmem_to_hbm [thread:$0]  %s1397, 2048, %s3, [#allocation3], 128, 128, 8
    $region17: #{tpu_custom_call.1} parent=1 // pred_fallthru
      _
    // Predicated region
    $region18: #{tpu_custom_call.1} parent=1 // pred_check
      _
    $region19: #{tpu_custom_call.1} parent=1 // pred_check_branch
      %1404 = sbr.rel (0) target = $region21
    $region20: #{tpu_custom_call.1} parent=1 // pred_region
      %1405 = dma.done [#allocation3], 2048
    $region21: #{tpu_custom_call.1} parent=1 // pred_fallthru
      _
    %1406 = vsyncpa [#allocation3], 1

</llo_original>
